<compile_context>
chip_gen: v6e
topology: v6e:2x2x1
jax: 0.10.0
libtpu: 0.0.40
codegen_flags: <defaults>
</compile_context>

<pallas_src>
import math

import jax
import jax.numpy as jnp
from jax.experimental import pallas as pl
from jax.experimental.pallas import tpu as pltpu


# TODO(synk): backward (hardtanh on grad_output) is a custom autograd rule and
# is not part of the forward; it is not implemented here.

_LANE = 128
# Below this element count a single fused XLA elementwise op is strictly
# faster than a pallas_call launch (+ any layout plumbing).
_PALLAS_MIN_ELEMS = 1 << 16
# Target ~512K elements per block (~2 MiB f32, ~1 MiB bf16).
_TARGET_BLOCK_ELEMS = 512 * 1024


def _ste_kernel(x_ref, o_ref):
    # Elementwise threshold on the VPU in the input's native dtype;
    # cast only the {0,1} result to the output dtype.
    o_ref[...] = (x_ref[...] > 0.5).astype(o_ref.dtype)


def straight_through_estimator(x, *, force_pallas=False):
    """Forward pass of StraightThroughEstimator: (x > 0.5).float().

    x: any-shape array (e.g. NCHW). Returns float32 array of the same shape.
    """
    orig_shape = x.shape
    n = int(math.prod(orig_shape)) if orig_shape else 1

    if n == 0:
        return jnp.zeros(orig_shape, jnp.float32)

    # Fast path: tiny inputs -> fused XLA elementwise (kernel launch overhead
    # would dominate the ~KBs of work).
    if not force_pallas and n < _PALLAS_MIN_ELEMS:
        return (x > 0.5).astype(jnp.float32)

    # Flatten to 1-D (free, row-major) and pick a lane-dense width C that
    # divides n so no padding pass is needed in the common case.
    flat = x.reshape(-1)
    C = None
    for cand in (1024, 512, 256, 128):
        if n % cand == 0:
            C = cand
            break
    if C is None:
        # Odd element count: pad only the tail up to one lane row.
        C = _LANE
        pad = (-n) % C
        flat = jnp.pad(flat, (0, pad))
    n_padded = flat.shape[0]
    R = n_padded // C
    x2 = flat.reshape(R, C)

    # Row-tile sized for ~2 MiB f32 blocks; multiple of 8 (sublane) unless it
    # spans the full row extent. Ragged last block is handled by pl.cdiv grid.
    tile_r = min(R, max(1, _TARGET_BLOCK_ELEMS // C))
    if tile_r != R:
        tile_r = max(8, (tile_r // 8) * 8)
    grid = (pl.cdiv(R, tile_r),)

    out2 = pl.pallas_call(
        _ste_kernel,
        out_shape=jax.ShapeDtypeStruct((R, C), jnp.float32),
        grid=grid,
        in_specs=[pl.BlockSpec((tile_r, C), lambda i: (i, 0))],
        out_specs=pl.BlockSpec((tile_r, C), lambda i: (i, 0)),
        compiler_params=pltpu.CompilerParams(
            dimension_semantics=("parallel",)
        ),
    )(x2)

    out_flat = out2.reshape(-1)
    if n_padded != n:
        out_flat = out_flat[:n]
    return out_flat.reshape(orig_shape)


if __name__ == "__main__":
    key = jax.random.PRNGKey(0)
    k_small, k_big = jax.random.split(key)

    # Small NCHW input consistent with a conv-style pipeline: [2, 4, 16, 16]
    x = jax.random.uniform(k_small, (2, 4, 16, 16), dtype=jnp.float32)

    # Auto path (small input -> XLA fast path) and forced Pallas-kernel path.
    y_auto = straight_through_estimator(x)
    y_kern = straight_through_estimator(x, force_pallas=True)

    # Larger bf16 input that takes the Pallas path automatically (exercises
    # native-dtype compare + lane-dense slab tiling).
    xb = jax.random.uniform(k_big, (8, 16, 32, 32), dtype=jnp.float32)
    xb = xb.astype(jnp.bfloat16)
    yb = straight_through_estimator(xb)

    jax.block_until_ready((y_auto, y_kern, yb))

    ref = (x > 0.5).astype(jnp.float32)
    ref_b = (xb > 0.5).astype(jnp.float32)

    assert y_auto.shape == x.shape and y_auto.dtype == jnp.float32
    assert y_kern.shape == x.shape and y_kern.dtype == jnp.float32
    assert yb.shape == xb.shape and yb.dtype == jnp.float32
    assert bool(jnp.all(y_auto == ref)), "auto path mismatch vs reference"
    assert bool(jnp.all(y_kern == ref)), "pallas path mismatch vs reference"
    assert bool(jnp.all(yb == ref_b)), "bf16 pallas path mismatch vs reference"

    print("KERNEL_OK")
</pallas_src>

<mosaic_0001>
module attributes {stable_mosaic.version = 11 : i64} {
  func.func @_ste_kernel(%arg0: i32, %arg1: memref<2x1024xf32, #tpu.memory_space<vmem>>, %arg2: memref<2x1024xf32, #tpu.memory_space<vmem>>) attributes {dimension_semantics = [#tpu.dimension_semantics<parallel>], iteration_bounds = array<i64: 1>, scalar_prefetch = 0 : i64, scratch_operands = 0 : i64, tpu.core_type = #tpu.core_type<tc>, window_params = [{transform_indices = @transform_0, window_bounds = array<i64: 2, 1024>}, {transform_indices = @transform_1, window_bounds = array<i64: 2, 1024>}]} {
    %c0 = arith.constant 0 : index
    %c0_0 = arith.constant 0 : index
    %0 = vector.load %arg1[%c0, %c0_0] : memref<2x1024xf32, #tpu.memory_space<vmem>>, vector<2x1024xf32>
    %cst = arith.constant 5.000000e-01 : f32
    %1 = vector.broadcast %cst : f32 to vector<2x1024xf32>
    %2 = arith.cmpf ogt, %0, %1 : vector<2x1024xf32>
    %3 = arith.extui %2 : vector<2x1024xi1> to vector<2x1024xi32>
    %4 = arith.sitofp %3 : vector<2x1024xi32> to vector<2x1024xf32>
    %c0_1 = arith.constant 0 : index
    %c0_2 = arith.constant 0 : index
    %5 = vector.load %arg2[%c0_1, %c0_2] : memref<2x1024xf32, #tpu.memory_space<vmem>>, vector<2x1024xf32>
    tpu.vector_store %arg2[%c0_1, %c0_2], %4 {strides = array<i32>} : memref<2x1024xf32, #tpu.memory_space<vmem>>, vector<2x1024xf32>,
    return
  }
  func.func @transform_0(%arg0: i32) -> (i32, i32) {
    %c0_i32 = arith.constant 0 : i32
    %c0_i32_0 = arith.constant 0 : i32
    return %arg0, %c0_i32 : i32, i32
  }
  func.func @transform_1(%arg0: i32) -> (i32, i32) {
    %c0_i32 = arith.constant 0 : i32
    %c0_i32_0 = arith.constant 0 : i32
    return %arg0, %c0_i32 : i32, i32
  }
}

</mosaic_0001>

<llo_original>
// kernel: tpu_custom_call.1
$region0: #{tpu_custom_call.1}
  #allocation0 [shape = 'u32[]', space=smem, size = 0x4, offset = 0x4, fixed_abs, tag = 'smem constant byte address 0x4 - core index']
  #allocation1 [shape = 'u32[144,128]{1,0:T(1,128)}', space=vmem, size = 0x12000, scoped, tag = 'internal scratch']
  %s0 = inlined_call_operand.hbm [shape: f32[2,1024], index: 0, kind: input, shape index: {}]
  %s1 = inlined_call_operand.hbm [shape: f32[2,1024], index: 1, kind: output, shape index: {}]
  %s2 = sld [smem:[#allocation0]]
  $region18: #{tpu_custom_call.1} parent=0
    _
  %s4 = ssub.s32 1, %s2
  %s5 = scalar_select 0, %s4, %s2
  $region1: #{tpu_custom_call.1} parent=0
    #allocation2 [shape = 'u8[8192]{0}', space=vmem, size = 0x2000, scoped, tag = 'input window, operand 0, single buffered']
    #allocation3 [shape = 's32[1]{0}', space=sflag, size = 0x4, scoped, tag = 'scoped memory for tpu_custom_call.1']
    #allocation4 [shape = 's32[1]{0}', space=sflag, size = 0x4, scoped, tag = 'scoped memory for tpu_custom_call.1']
    #allocation5 [shape = 'u8[8192]{0}', space=vmem, size = 0x2000, scoped, tag = 'output window, operand 0, single buffered']
    %6 = vsyncpa [#allocation3], 0
    %7 = vsyncpa [#allocation4], 0
    // Predicated region
    $region2: #{tpu_custom_call.1} parent=1 // pred_check
      _
    $region3: #{tpu_custom_call.1} parent=1 // pred_check_branch
      %9 = sbr.rel (0) target = $region5
    $region4: #{tpu_custom_call.1} parent=1 // pred_region
      %s11 = ssub.s32 256, 256
      %12 = vsyncadd [#allocation3], %s11
      %s14 = sshll.u32 [#allocation2], 4
      %s15 = int_to_ptr.vmem [resolvable:$true] %s14
      %17 = dma.hbm_to_vmem [thread:$0]  %s0, 256, %s15, [#allocation3]
    $region5: #{tpu_custom_call.1} parent=1 // pred_fallthru
      _
    // Predicated region
    $region6: #{tpu_custom_call.1} parent=1 // pred_check
      _
    $region7: #{tpu_custom_call.1} parent=1 // pred_check_branch
      %19 = sbr.rel (0) target = $region9
    $region8: #{tpu_custom_call.1} parent=1 // pred_region
      %20 = dma.done [#allocation3], 256
    $region9: #{tpu_custom_call.1} parent=1 // pred_fallthru
      _
    %v21 = vld [vmem:[#allocation2] sm:$0xff]
    %v22 = vld [vmem:[#allocation2 + $0x8] sm:$0xff]
    %vm23 = vcmp.gt.f32.partialorder %v21, 0.5
    %vm24 = vcmp.gt.f32.partialorder %v22, 0.5
    %v25 = vsel %vm23, 1, 0
    %v26 = vsel %vm24, 1, 0
    %v27 = vcvt.s32.f32 %v25
    %v28 = vcvt.s32.f32 %v26
    %29 = vst [vmem:[#allocation5] sm:$0xff] %v27
    %30 = vst [vmem:[#allocation5 + $0x8] sm:$0xff] %v28
    // Predicated region
    $region10: #{tpu_custom_call.1} parent=1 // pred_check
      _
    $region11: #{tpu_custom_call.1} parent=1 // pred_check_branch
      %32 = sbr.rel (0) target = $region13
    $region12: #{tpu_custom_call.1} parent=1 // pred_region
      %s34 = ssub.s32 256, 256
      %35 = vsyncadd [#allocation4], %s34
      %s37 = sshll.u32 [#allocation5], 4
      %s38 = int_to_ptr.vmem [resolvable:$true] %s37
      %40 = dma.vmem_to_hbm [thread:$0]  %s38, 256, %s1, [#allocation4]
    $region13: #{tpu_custom_call.1} parent=1 // pred_fallthru
      _
    // Predicated region
    $region14: #{tpu_custom_call.1} parent=1 // pred_check
      _
    $region15: #{tpu_custom_call.1} parent=1 // pred_check_branch
      %42 = sbr.rel (0) target = $region17
    $region16: #{tpu_custom_call.1} parent=1 // pred_region
      %43 = dma.done [#allocation4], 256
    $region17: #{tpu_custom_call.1} parent=1 // pred_fallthru
      _
    %44 = vsyncpa [#allocation3], 1
    %45 = vsyncpa [#allocation4], 1

</llo_original>
